<compile_context>
chip_gen: v6e
topology: v6e:2x2x1
jax: 0.10.0
libtpu: 0.0.40
codegen_flags: <defaults>
</compile_context>

<pallas_src>
import functools

import jax
import jax.numpy as jnp
from jax.experimental import pallas as pl
from jax.experimental.pallas import tpu as pltpu


def _vae_fwd_kernel(x_ref, we1_ref, be1_ref, wml_ref, bml_ref, eps_ref,
                    wd1_ref, bd1_ref, wd2_ref, bd2_ref, out_ref, h_acc):
    c = pl.program_id(1)
    nc = pl.num_programs(1)

    # ----- encoder first layer: accumulate over the C (contraction) tiles -----
    @pl.when(c == 0)
    def _():
        h_acc[...] = jnp.zeros_like(h_acc)

    h_acc[...] += jnp.dot(x_ref[...], we1_ref[...],
                          preferred_element_type=jnp.float32)

    # ----- finalize on the last C tile: heads, reparameterize, decoder -----
    @pl.when(c == nc - 1)
    def _():
        latent = wd1_ref.shape[0]
        h = jnp.maximum(h_acc[...] + be1_ref[...], 0.0)

        # fused mu / logvar head: one (E, 2L) matmul, then slice
        y = jnp.dot(h, wml_ref[...], preferred_element_type=jnp.float32) + bml_ref[...]
        mu = y[:, :latent]
        logv = y[:, latent:]

        # reparameterize: z = mu + exp(logvar) * eps  (eps already broadcast to (TB, L))
        z = mu + jnp.exp(logv) * eps_ref[...]

        hd = jnp.maximum(
            jnp.dot(z, wd1_ref[...], preferred_element_type=jnp.float32) + bd1_ref[...],
            0.0)
        out_ref[...] = (jnp.dot(hd, wd2_ref[...], preferred_element_type=jnp.float32)
                        + bd2_ref[...]).astype(out_ref.dtype)


def _round_up(n, m):
    return (n + m - 1) // m * m


@functools.partial(jax.jit, static_argnames=("tb", "tc_max"))
def vae_forward(x, params, eps, *, tb=128, tc_max=512):
    """x: (B, C) float32; eps: (B, 1) float32 (same noise per latent dim, per module)."""
    we1, be1, wml, bml, wd1, bd1, wd2, bd2 = params
    B, C = x.shape
    E = we1.shape[1]
    L2 = wml.shape[1]
    L = L2 // 2
    D = wd1.shape[1]

    # pre-broadcast eps across the latent dim (dense lane block in-kernel)
    eps_full = jnp.broadcast_to(eps.astype(jnp.float32), (B, L))

    # pad batch to >=128-row MXU tiles, pad C to a lane-dense multiple of 128
    Bp = _round_up(max(B, 1), tb)
    Cp = _round_up(C, 128)
    tc = tc_max if Cp % tc_max == 0 else (256 if Cp % 256 == 0 else 128)

    x_p = jnp.zeros((Bp, Cp), jnp.float32).at[:B, :C].set(x.astype(jnp.float32))
    eps_p = jnp.zeros((Bp, L), jnp.float32).at[:B, :].set(eps_full)
    we1_p = jnp.zeros((Cp, E), jnp.float32).at[:C, :].set(we1)
    wd2_p = jnp.zeros((D, Cp), jnp.float32).at[:, :C].set(wd2)
    bd2_p = jnp.zeros((1, Cp), jnp.float32).at[:, :C].set(bd2)

    nb = Bp // tb
    nc = Cp // tc
    grid = (nb, nc)

    in_specs = [
        pl.BlockSpec((tb, tc), lambda b, c: (b, c)),    # x       (streamed per (b, c))
        pl.BlockSpec((tc, E), lambda b, c: (c, 0)),     # We1     (streamed per c tile)
        pl.BlockSpec((1, E), lambda b, c: (0, 0)),      # be1     (resident)
        pl.BlockSpec((E, L2), lambda b, c: (0, 0)),     # Wmu|Wlv (resident)
        pl.BlockSpec((1, L2), lambda b, c: (0, 0)),     # bmu|blv (resident)
        pl.BlockSpec((tb, L), lambda b, c: (b, 0)),     # eps     (per batch tile)
        pl.BlockSpec((L, D), lambda b, c: (0, 0)),      # Wd1     (resident)
        pl.BlockSpec((1, D), lambda b, c: (0, 0)),      # bd1     (resident)
        pl.BlockSpec((D, Cp), lambda b, c: (0, 0)),     # Wd2     (small, resident)
        pl.BlockSpec((1, Cp), lambda b, c: (0, 0)),     # bd2     (resident)
    ]
    out_specs = pl.BlockSpec((tb, Cp), lambda b, c: (b, 0))   # accumulator across c

    # rough VMEM budget (double-buffering conservatively) capped to v7x physical
    f32 = 4
    vmem_est = 2 * f32 * (tb * tc + tc * E + tb * Cp + D * Cp + Cp
                          + E + E * L2 + L2 + tb * L + L * D + D) + f32 * tb * E
    vmem_limit = int(min(max(vmem_est * 1.25, 32 * 2**20), 64 * 2**20))

    out_p = pl.pallas_call(
        _vae_fwd_kernel,
        out_shape=jax.ShapeDtypeStruct((Bp, Cp), jnp.float32),
        grid=grid,
        in_specs=in_specs,
        out_specs=out_specs,
        scratch_shapes=[pltpu.VMEM((tb, E), jnp.float32)],   # encoder-hidden accumulator
        compiler_params=pltpu.CompilerParams(
            dimension_semantics=("parallel", "arbitrary"),
            vmem_limit_bytes=vmem_limit),
    )(x_p, we1_p, be1, wml, bml, eps_p, wd1, bd1, wd2_p, bd2_p)

    return out_p[:B, :C]


def _linear_params(key, fan_in, fan_out):
    """Deterministic PyTorch-style Linear init: U(-1/sqrt(fan_in), 1/sqrt(fan_in))."""
    kw, kb = jax.random.split(key)
    bound = 1.0 / jnp.sqrt(jnp.float32(fan_in))
    w = jax.random.uniform(kw, (fan_in, fan_out), jnp.float32, -bound, bound)
    b = jax.random.uniform(kb, (1, fan_out), jnp.float32, -bound, bound)
    return w, b


def init_vae_params(key, c_len, e_hidden, d_hidden, latent):
    k1, k2, k3, k4, k5 = jax.random.split(key, 5)
    we1, be1 = _linear_params(k1, c_len, e_hidden)      # encoder hidden
    wmu, bmu = _linear_params(k2, e_hidden, latent)     # mu head
    wlv, blv = _linear_params(k3, e_hidden, latent)     # logvar head
    wml = jnp.concatenate([wmu, wlv], axis=1)           # fused (E, 2L) head
    bml = jnp.concatenate([bmu, blv], axis=1)
    wd1, bd1 = _linear_params(k4, latent, d_hidden)     # decoder hidden
    wd2, bd2 = _linear_params(k5, d_hidden, c_len)      # reconstruction
    return (we1, be1, wml, bml, wd1, bd1, wd2, bd2)


def _reference_forward(x, params, eps):
    we1, be1, wml, bml, wd1, bd1, wd2, bd2 = params
    L = wd1.shape[0]
    h = jnp.maximum(x @ we1 + be1, 0.0)
    y = h @ wml + bml
    mu, logv = y[:, :L], y[:, L:]
    z = mu + jnp.exp(logv) * eps            # eps (B,1) broadcasts across latent
    hd = jnp.maximum(z @ wd1 + bd1, 0.0)
    return hd @ wd2 + bd2


if __name__ == "__main__":
    # Small shapes consistent with the module (c_len features, encoder hidden,
    # d_dim=[8] decoder hidden, l_dim=16 latent).
    B, C_LEN, E_HID, D_HID, LATENT = 8, 256, 128, 8, 16

    key = jax.random.PRNGKey(0)
    kx, kp, ke = jax.random.split(key, 3)

    x = jax.random.normal(kx, (B, C_LEN), jnp.float32)
    params = init_vae_params(kp, C_LEN, E_HID, D_HID, LATENT)
    # eps ~ N(0, 0.25) of shape (B, 1), expanded across the latent dim (as in the module)
    eps = 0.25 * jax.random.normal(ke, (B, 1), jnp.float32)

    out = vae_forward(x, params, eps)
    jax.block_until_ready(out)

    ref = _reference_forward(x, params, eps)
    assert out.shape == (B, C_LEN)
    assert jnp.allclose(out, ref, atol=1e-4, rtol=1e-4), "mismatch vs JAX reference"

    print("KERNEL_OK")
</pallas_src>

<mosaic_0001>
module attributes {stable_mosaic.version = 11 : i64} {
  func.func @_vae_fwd_kernel(%arg0: i32, %arg1: i32, %arg2: memref<128x256xf32, #tpu.memory_space<vmem>>, %arg3: memref<256x128xf32, #tpu.memory_space<vmem>>, %arg4: memref<1x128xf32, #tpu.memory_space<vmem>>, %arg5: memref<128x32xf32, #tpu.memory_space<vmem>>, %arg6: memref<1x32xf32, #tpu.memory_space<vmem>>, %arg7: memref<128x16xf32, #tpu.memory_space<vmem>>, %arg8: memref<16x8xf32, #tpu.memory_space<vmem>>, %arg9: memref<1x8xf32, #tpu.memory_space<vmem>>, %arg10: memref<8x256xf32, #tpu.memory_space<vmem>>, %arg11: memref<1x256xf32, #tpu.memory_space<vmem>>, %arg12: memref<128x256xf32, #tpu.memory_space<vmem>>, %arg13: memref<128x128xf32, #tpu.memory_space<vmem>>) attributes {dimension_semantics = [#tpu.dimension_semantics<parallel>, #tpu.dimension_semantics<arbitrary>], iteration_bounds = array<i64: 1, 1>, scalar_prefetch = 0 : i64, scratch_operands = 1 : i64, tpu.core_type = #tpu.core_type<tc>, window_params = [{transform_indices = @transform_0, window_bounds = array<i64: 128, 256>}, {transform_indices = @transform_1, window_bounds = array<i64: 256, 128>}, {pipeline_mode = #tpu.pipeline_mode<synchronous>, transform_indices = @transform_2, window_bounds = array<i64: 1, 128>}, {pipeline_mode = #tpu.pipeline_mode<synchronous>, transform_indices = @transform_3, window_bounds = array<i64: 128, 32>}, {pipeline_mode = #tpu.pipeline_mode<synchronous>, transform_indices = @transform_4, window_bounds = array<i64: 1, 32>}, {transform_indices = @transform_5, window_bounds = array<i64: 128, 16>}, {pipeline_mode = #tpu.pipeline_mode<synchronous>, transform_indices = @transform_6, window_bounds = array<i64: 16, 8>}, {pipeline_mode = #tpu.pipeline_mode<synchronous>, transform_indices = @transform_7, window_bounds = array<i64: 1, 8>}, {pipeline_mode = #tpu.pipeline_mode<synchronous>, transform_indices = @transform_8, window_bounds = array<i64: 8, 256>}, {pipeline_mode = #tpu.pipeline_mode<synchronous>, transform_indices = @transform_9, window_bounds = array<i64: 1, 256>}, {transform_indices = @transform_10, window_bounds = array<i64: 128, 256>}]} {
    %c0_i32 = arith.constant 0 : i32
    %0 = arith.cmpi eq, %arg1, %c0_i32 : i32
    %1 = arith.extui %0 : i1 to i32
    %c0_i32_0 = arith.constant 0 : i32
    %2 = arith.cmpi ne, %1, %c0_i32_0 : i32
    scf.if %2 {
      %cst_10 = arith.constant 0.000000e+00 : f32
      %12 = vector.broadcast %cst_10 : f32 to vector<128x128xf32>
      %c0_11 = arith.constant 0 : index
      %c0_12 = arith.constant 0 : index
      %13 = vector.load %arg13[%c0_11, %c0_12] : memref<128x128xf32, #tpu.memory_space<vmem>>, vector<128x128xf32>
      tpu.vector_store %arg13[%c0_11, %c0_12], %12 {strides = array<i32>} : memref<128x128xf32, #tpu.memory_space<vmem>>, vector<128x128xf32>,
    } else {
    }
    %c0 = arith.constant 0 : index
    %c0_1 = arith.constant 0 : index
    %3 = vector.load %arg13[%c0, %c0_1] : memref<128x128xf32, #tpu.memory_space<vmem>>, vector<128x128xf32>
    %c0_2 = arith.constant 0 : index
    %c0_3 = arith.constant 0 : index
    %4 = vector.load %arg2[%c0_2, %c0_3] : memref<128x256xf32, #tpu.memory_space<vmem>>, vector<128x256xf32>
    %c0_4 = arith.constant 0 : index
    %c0_5 = arith.constant 0 : index
    %5 = vector.load %arg3[%c0_4, %c0_5] : memref<256x128xf32, #tpu.memory_space<vmem>>, vector<256x128xf32>
    %cst = arith.constant dense<0.000000e+00> : vector<128x128xf32>
    %6 = tpu.matmul %4, %5, %cst {dimension_numbers = #tpu.dot_dimension_numbers<[1], [0], [0], [1], [0, 0, 1, 1], [], []>} : vector<128x256xf32>, vector<256x128xf32>, vector<128x128xf32> -> vector<128x128xf32>
    %7 = arith.addf %3, %6 : vector<128x128xf32>
    %c0_6 = arith.constant 0 : index
    %c0_7 = arith.constant 0 : index
    %8 = vector.load %arg13[%c0_6, %c0_7] : memref<128x128xf32, #tpu.memory_space<vmem>>, vector<128x128xf32>
    tpu.vector_store %arg13[%c0_6, %c0_7], %7 {strides = array<i32>} : memref<128x128xf32, #tpu.memory_space<vmem>>, vector<128x128xf32>,
    %c0_i32_8 = arith.constant 0 : i32
    %9 = arith.cmpi eq, %arg1, %c0_i32_8 : i32
    %10 = arith.extui %9 : i1 to i32
    %c0_i32_9 = arith.constant 0 : i32
    %11 = arith.cmpi ne, %10, %c0_i32_9 : i32
    scf.if %11 {
      %c0_10 = arith.constant 0 : index
      %c0_11 = arith.constant 0 : index
      %12 = vector.load %arg13[%c0_10, %c0_11] : memref<128x128xf32, #tpu.memory_space<vmem>>, vector<128x128xf32>
      %c0_12 = arith.constant 0 : index
      %c0_13 = arith.constant 0 : index
      %13 = vector.load %arg4[%c0_12, %c0_13] : memref<1x128xf32, #tpu.memory_space<vmem>>, vector<1x128xf32>
      %14 = vector.broadcast %13 : vector<1x128xf32> to vector<128x128xf32>
      %15 = arith.addf %12, %14 : vector<128x128xf32>
      %cst_14 = arith.constant 0.000000e+00 : f32
      %16 = vector.broadcast %cst_14 : f32 to vector<128x128xf32>
      %17 = arith.maximumf %15, %16 : vector<128x128xf32>
      %c0_15 = arith.constant 0 : index
      %c0_16 = arith.constant 0 : index
      %18 = vector.load %arg5[%c0_15, %c0_16] : memref<128x32xf32, #tpu.memory_space<vmem>>, vector<128x32xf32>
      %cst_17 = arith.constant dense<0.000000e+00> : vector<128x32xf32>
      %19 = tpu.matmul %17, %18, %cst_17 {dimension_numbers = #tpu.dot_dimension_numbers<[1], [0], [0], [1], [0, 0, 1, 1], [], []>} : vector<128x128xf32>, vector<128x32xf32>, vector<128x32xf32> -> vector<128x32xf32>
      %c0_18 = arith.constant 0 : index
      %c0_19 = arith.constant 0 : index
      %20 = vector.load %arg6[%c0_18, %c0_19] : memref<1x32xf32, #tpu.memory_space<vmem>>, vector<1x32xf32>
      %21 = vector.broadcast %20 : vector<1x32xf32> to vector<128x32xf32>
      %22 = arith.addf %19, %21 : vector<128x32xf32>
      %23 = vector.extract_strided_slice %22 {offsets = [0, 0], sizes = [128, 16], strides = [1, 1]} : vector<128x32xf32> to vector<128x16xf32>
      %24 = vector.extract_strided_slice %22 {offsets = [0, 16], sizes = [128, 16], strides = [1, 1]} : vector<128x32xf32> to vector<128x16xf32>
      %25 = math.exp %24 : vector<128x16xf32>
      %c0_20 = arith.constant 0 : index
      %c0_21 = arith.constant 0 : index
      %26 = vector.load %arg7[%c0_20, %c0_21] : memref<128x16xf32, #tpu.memory_space<vmem>>, vector<128x16xf32>
      %27 = arith.mulf %25, %26 : vector<128x16xf32>
      %28 = arith.addf %23, %27 : vector<128x16xf32>
      %c0_22 = arith.constant 0 : index
      %c0_23 = arith.constant 0 : index
      %29 = vector.load %arg8[%c0_22, %c0_23] : memref<16x8xf32, #tpu.memory_space<vmem>>, vector<16x8xf32>
      %cst_24 = arith.constant dense<0.000000e+00> : vector<128x8xf32>
      %30 = tpu.matmul %28, %29, %cst_24 {dimension_numbers = #tpu.dot_dimension_numbers<[1], [0], [0], [1], [0, 0, 1, 1], [], []>} : vector<128x16xf32>, vector<16x8xf32>, vector<128x8xf32> -> vector<128x8xf32>
      %c0_25 = arith.constant 0 : index
      %c0_26 = arith.constant 0 : index
      %31 = vector.load %arg9[%c0_25, %c0_26] : memref<1x8xf32, #tpu.memory_space<vmem>>, vector<1x8xf32>
      %32 = vector.broadcast %31 : vector<1x8xf32> to vector<128x8xf32>
      %33 = arith.addf %30, %32 : vector<128x8xf32>
      %cst_27 = arith.constant 0.000000e+00 : f32
      %34 = vector.broadcast %cst_27 : f32 to vector<128x8xf32>
      %35 = arith.maximumf %33, %34 : vector<128x8xf32>
      %c0_28 = arith.constant 0 : index
      %c0_29 = arith.constant 0 : index
      %36 = vector.load %arg10[%c0_28, %c0_29] : memref<8x256xf32, #tpu.memory_space<vmem>>, vector<8x256xf32>
      %cst_30 = arith.constant dense<0.000000e+00> : vector<128x256xf32>
      %37 = tpu.matmul %35, %36, %cst_30 {dimension_numbers = #tpu.dot_dimension_numbers<[1], [0], [0], [1], [0, 0, 1, 1], [], []>} : vector<128x8xf32>, vector<8x256xf32>, vector<128x256xf32> -> vector<128x256xf32>
      %c0_31 = arith.constant 0 : index
      %c0_32 = arith.constant 0 : index
      %38 = vector.load %arg11[%c0_31, %c0_32] : memref<1x256xf32, #tpu.memory_space<vmem>>, vector<1x256xf32>
      %39 = vector.broadcast %38 : vector<1x256xf32> to vector<128x256xf32>
      %40 = arith.addf %37, %39 : vector<128x256xf32>
      %c0_33 = arith.constant 0 : index
      %c0_34 = arith.constant 0 : index
      %41 = vector.load %arg12[%c0_33, %c0_34] : memref<128x256xf32, #tpu.memory_space<vmem>>, vector<128x256xf32>
      tpu.vector_store %arg12[%c0_33, %c0_34], %40 {strides = array<i32>} : memref<128x256xf32, #tpu.memory_space<vmem>>, vector<128x256xf32>,
    } else {
    }
    return
  }
  func.func @transform_0(%arg0: i32, %arg1: i32) -> (i32, i32) {
    %c0_i32 = arith.constant 0 : i32
    return %arg0, %arg1 : i32, i32
  }
  func.func @transform_1(%arg0: i32, %arg1: i32) -> (i32, i32) {
    %c0_i32 = arith.constant 0 : i32
    %c0_i32_0 = arith.constant 0 : i32
    return %arg1, %c0_i32 : i32, i32
  }
  func.func @transform_2(%arg0: i32, %arg1: i32) -> (i32, i32) {
    %c0_i32 = arith.constant 0 : i32
    %c0_i32_0 = arith.constant 0 : i32
    %c0_i32_1 = arith.constant 0 : i32
    return %c0_i32, %c0_i32_0 : i32, i32
  }
  func.func @transform_3(%arg0: i32, %arg1: i32) -> (i32, i32) {
    %c0_i32 = arith.constant 0 : i32
    %c0_i32_0 = arith.constant 0 : i32
    %c0_i32_1 = arith.constant 0 : i32
    return %c0_i32, %c0_i32_0 : i32, i32
  }
  func.func @transform_4(%arg0: i32, %arg1: i32) -> (i32, i32) {
    %c0_i32 = arith.constant 0 : i32
    %c0_i32_0 = arith.constant 0 : i32
    %c0_i32_1 = arith.constant 0 : i32
    return %c0_i32, %c0_i32_0 : i32, i32
  }
  func.func @transform_5(%arg0: i32, %arg1: i32) -> (i32, i32) {
    %c0_i32 = arith.constant 0 : i32
    %c0_i32_0 = arith.constant 0 : i32
    return %arg0, %c0_i32 : i32, i32
  }
  func.func @transform_6(%arg0: i32, %arg1: i32) -> (i32, i32) {
    %c0_i32 = arith.constant 0 : i32
    %c0_i32_0 = arith.constant 0 : i32
    %c0_i32_1 = arith.constant 0 : i32
    return %c0_i32, %c0_i32_0 : i32, i32
  }
  func.func @transform_7(%arg0: i32, %arg1: i32) -> (i32, i32) {
    %c0_i32 = arith.constant 0 : i32
    %c0_i32_0 = arith.constant 0 : i32
    %c0_i32_1 = arith.constant 0 : i32
    return %c0_i32, %c0_i32_0 : i32, i32
  }
  func.func @transform_8(%arg0: i32, %arg1: i32) -> (i32, i32) {
    %c0_i32 = arith.constant 0 : i32
    %c0_i32_0 = arith.constant 0 : i32
    %c0_i32_1 = arith.constant 0 : i32
    return %c0_i32, %c0_i32_0 : i32, i32
  }
  func.func @transform_9(%arg0: i32, %arg1: i32) -> (i32, i32) {
    %c0_i32 = arith.constant 0 : i32
    %c0_i32_0 = arith.constant 0 : i32
    %c0_i32_1 = arith.constant 0 : i32
    return %c0_i32, %c0_i32_0 : i32, i32
  }
  func.func @transform_10(%arg0: i32, %arg1: i32) -> (i32, i32) {
    %c0_i32 = arith.constant 0 : i32
    %c0_i32_0 = arith.constant 0 : i32
    return %arg0, %c0_i32 : i32, i32
  }
}

</mosaic_0001>

<llo_original>
// kernel: vae_forward.1
$region0: #{vae_forward.1}
  #allocation0 [shape = 'u32[]', space=smem, size = 0x4, offset = 0x4, fixed_abs, tag = 'smem constant byte address 0x4 - core index']
  #allocation1 [shape = 'u32[144,128]{1,0:T(1,128)}', space=vmem, size = 0x12000, scoped, tag = 'internal scratch']
  #allocation2 [shape = 'f32[128,128]{1,0:T(8,128)}', space=vmem, size = 0x10000, scoped, tag = 'scratch operand']
  %s0 = inlined_call_operand.vmem [shape: f32[128,256], index: 0, kind: input, shape index: {}]
  %s1 = inlined_call_operand.vmem [shape: f32[256,128], index: 1, kind: input, shape index: {}]
  %s2 = inlined_call_operand.vmem [shape: f32[1,128], index: 2, kind: input, shape index: {}]
  %s3 = inlined_call_operand.vmem [shape: f32[128,32], index: 3, kind: input, shape index: {}]
  %s4 = inlined_call_operand.vmem [shape: f32[1,32], index: 4, kind: input, shape index: {}]
  %s5 = inlined_call_operand.vmem [shape: f32[128,16], index: 5, kind: input, shape index: {}]
  %s6 = inlined_call_operand.vmem [shape: f32[16,8], index: 6, kind: input, shape index: {}]
  %s7 = inlined_call_operand.vmem [shape: f32[1,8], index: 7, kind: input, shape index: {}]
  %s8 = inlined_call_operand.vmem [shape: f32[8,256], index: 8, kind: input, shape index: {}]
  %s9 = inlined_call_operand.vmem [shape: f32[1,256], index: 9, kind: input, shape index: {}]
  %s10 = inlined_call_operand.vmem [shape: f32[128,256], index: 10, kind: output, shape index: {}]
  %s11 = sld [smem:[#allocation0]]
  $region58: #{vae_forward.1} parent=0
    _
  %s13 = ssub.s32 1, %s11
  %s14 = scalar_select 0, %s13, %s11
  // Predicated region
  $region2: #{vae_forward.1} parent=0 // pred_check
    _
  $region3: #{vae_forward.1} parent=0 // pred_check_branch
    %16 = sbr.rel (0) target = $region5
  $region4: #{vae_forward.1} parent=0 // pred_region
    _
  $region5: #{vae_forward.1} parent=0 // pred_fallthru
    _
  // Predicated region
  $region6: #{vae_forward.1} parent=0 // pred_check
    _
  $region7: #{vae_forward.1} parent=0 // pred_check_branch
    %18 = sbr.rel (0) target = $region9
  $region8: #{vae_forward.1} parent=0 // pred_region
    _
  $region9: #{vae_forward.1} parent=0 // pred_fallthru
    _
  // Predicated region
  $region10: #{vae_forward.1} parent=0 // pred_check
    _
  $region11: #{vae_forward.1} parent=0 // pred_check_branch
    %20 = sbr.rel (0) target = $region13
  $region12: #{vae_forward.1} parent=0 // pred_region
    _
  $region13: #{vae_forward.1} parent=0 // pred_fallthru
    _
  // Predicated region
  $region14: #{vae_forward.1} parent=0 // pred_check
    _
  $region15: #{vae_forward.1} parent=0 // pred_check_branch
    %22 = sbr.rel (0) target = $region17
  $region16: #{vae_forward.1} parent=0 // pred_region
    _
  $region17: #{vae_forward.1} parent=0 // pred_fallthru
    _
  // Predicated region
  $region18: #{vae_forward.1} parent=0 // pred_check
    _
  $region19: #{vae_forward.1} parent=0 // pred_check_branch
    %24 = sbr.rel (0) target = $region21
  $region20: #{vae_forward.1} parent=0 // pred_region
    _
  $region21: #{vae_forward.1} parent=0 // pred_fallthru
    _
  // Predicated region
  $region22: #{vae_forward.1} parent=0 // pred_check
    _
  $region23: #{vae_forward.1} parent=0 // pred_check_branch
    %26 = sbr.rel (0) target = $region25
  $region24: #{vae_forward.1} parent=0 // pred_region
    _
  $region25: #{vae_forward.1} parent=0 // pred_fallthru
    _
  // Predicated region
  $region26: #{vae_forward.1} parent=0 // pred_check
    _
  $region27: #{vae_forward.1} parent=0 // pred_check_branch
    %28 = sbr.rel (0) target = $region29
  $region28: #{vae_forward.1} parent=0 // pred_region
    _
  $region29: #{vae_forward.1} parent=0 // pred_fallthru
    _
  // Predicated region
  $region30: #{vae_forward.1} parent=0 // pred_check
    _
  $region31: #{vae_forward.1} parent=0 // pred_check_branch
    %30 = sbr.rel (0) target = $region33
  $region32: #{vae_forward.1} parent=0 // pred_region
    _
  $region33: #{vae_forward.1} parent=0 // pred_fallthru
    _
  // Predicated region
  $region34: #{vae_forward.1} parent=0 // pred_check
    _
  $region35: #{vae_forward.1} parent=0 // pred_check_branch
    %32 = sbr.rel (0) target = $region37
  $region36: #{vae_forward.1} parent=0 // pred_region
    _
  $region37: #{vae_forward.1} parent=0 // pred_fallthru
    _
  // Predicated region
  $region38: #{vae_forward.1} parent=0 // pred_check
    _
  $region39: #{vae_forward.1} parent=0 // pred_check_branch
    %34 = sbr.rel (0) target = $region41
  $region40: #{vae_forward.1} parent=0 // pred_region
    _
  $region41: #{vae_forward.1} parent=0 // pred_fallthru
    _
  %p35 = scmp.eq.s32.totalorder 0, 0
  // Predicated region
  $region42: #{vae_forward.1} parent=0 // pred_check
    %p36 = pneg %p35
  $region43: #{vae_forward.1} parent=0 // pred_check_branch
    %38 = sbr.rel (%p36) target = $region45
  $region44: #{vae_forward.1} parent=0 // pred_region
    %39 = vst [vmem:[#allocation2] sm:$0xff] 0.0
    %40 = vst [vmem:[#allocation2 + $0x8] sm:$0xff] 0.0
    %41 = vst [vmem:[#allocation2 + $0x10] sm:$0xff] 0.0
    %42 = vst [vmem:[#allocation2 + $0x18] sm:$0xff] 0.0
    %43 = vst [vmem:[#allocation2 + $0x20] sm:$0xff] 0.0
    %44 = vst [vmem:[#allocation2 + $0x28] sm:$0xff] 0.0
    %45 = vst [vmem:[#allocation2 + $0x30] sm:$0xff] 0.0
    %46 = vst [vmem:[#allocation2 + $0x38] sm:$0xff] 0.0
    %47 = vst [vmem:[#allocation2 + $0x40] sm:$0xff] 0.0
    %48 = vst [vmem:[#allocation2 + $0x48] sm:$0xff] 0.0
    %49 = vst [vmem:[#allocation2 + $0x50] sm:$0xff] 0.0
    %50 = vst [vmem:[#allocation2 + $0x58] sm:$0xff] 0.0
    %51 = vst [vmem:[#allocation2 + $0x60] sm:$0xff] 0.0
    %52 = vst [vmem:[#allocation2 + $0x68] sm:$0xff] 0.0
    %53 = vst [vmem:[#allocation2 + $0x70] sm:$0xff] 0.0
    %54 = vst [vmem:[#allocation2 + $0x78] sm:$0xff] 0.0
  $region45: #{vae_forward.1} parent=0 // pred_fallthru
    _
  %v55 = vld [vmem:[#allocation2] sm:$0xff]
  %v56 = vld [vmem:[#allocation2 + $0x8] sm:$0xff]
  %v57 = vld [vmem:[#allocation2 + $0x10] sm:$0xff]
  %v58 = vld [vmem:[#allocation2 + $0x18] sm:$0xff]
  %v59 = vld [vmem:[#allocation2 + $0x20] sm:$0xff]
  %v60 = vld [vmem:[#allocation2 + $0x28] sm:$0xff]
  %v61 = vld [vmem:[#allocation2 + $0x30] sm:$0xff]
  %v62 = vld [vmem:[#allocation2 + $0x38] sm:$0xff]
  %v63 = vld [vmem:[#allocation2 + $0x40] sm:$0xff]
  %v64 = vld [vmem:[#allocation2 + $0x48] sm:$0xff]
  %v65 = vld [vmem:[#allocation2 + $0x50] sm:$0xff]
  %v66 = vld [vmem:[#allocation2 + $0x58] sm:$0xff]
  %v67 = vld [vmem:[#allocation2 + $0x60] sm:$0xff]
  %v68 = vld [vmem:[#allocation2 + $0x68] sm:$0xff]
  %v69 = vld [vmem:[#allocation2 + $0x70] sm:$0xff]
  %v70 = vld [vmem:[#allocation2 + $0x78] sm:$0xff]
  %v71 = vld [vmem:[%s0] sm:$0xff]
  %v72 = vld [vmem:[%s0 + $0x8] sm:$0xff]
  %v73 = vld [vmem:[%s0 + $0x10] sm:$0xff]
  %v74 = vld [vmem:[%s0 + $0x18] sm:$0xff]
  %v75 = vld [vmem:[%s0 + $0x20] sm:$0xff]
  %v76 = vld [vmem:[%s0 + $0x28] sm:$0xff]
  %v77 = vld [vmem:[%s0 + $0x30] sm:$0xff]
  %v78 = vld [vmem:[%s0 + $0x38] sm:$0xff]
  %v79 = vld [vmem:[%s0 + $0x40] sm:$0xff]
  %v80 = vld [vmem:[%s0 + $0x48] sm:$0xff]
  %v81 = vld [vmem:[%s0 + $0x50] sm:$0xff]
  %v82 = vld [vmem:[%s0 + $0x58] sm:$0xff]
  %v83 = vld [vmem:[%s0 + $0x60] sm:$0xff]
  %v84 = vld [vmem:[%s0 + $0x68] sm:$0xff]
  %v85 = vld [vmem:[%s0 + $0x70] sm:$0xff]
  %v86 = vld [vmem:[%s0 + $0x78] sm:$0xff]
  %v87 = vld [vmem:[%s0 + $0x80] sm:$0xff]
  %v88 = vld [vmem:[%s0 + $0x88] sm:$0xff]
  %v89 = vld [vmem:[%s0 + $0x90] sm:$0xff]
  %v90 = vld [vmem:[%s0 + $0x98] sm:$0xff]
  %v91 = vld [vmem:[%s0 + $0xa0] sm:$0xff]
  %v92 = vld [vmem:[%s0 + $0xa8] sm:$0xff]
  %v93 = vld [vmem:[%s0 + $0xb0] sm:$0xff]
  %v94 = vld [vmem:[%s0 + $0xb8] sm:$0xff]
  %v95 = vld [vmem:[%s0 + $0xc0] sm:$0xff]
  %v96 = vld [vmem:[%s0 + $0xc8] sm:$0xff]
  %v97 = vld [vmem:[%s0 + $0xd0] sm:$0xff]
  %v98 = vld [vmem:[%s0 + $0xd8] sm:$0xff]
  %v99 = vld [vmem:[%s0 + $0xe0] sm:$0xff]
  %v100 = vld [vmem:[%s0 + $0xe8] sm:$0xff]
  %v101 = vld [vmem:[%s0 + $0xf0] sm:$0xff]
  %v102 = vld [vmem:[%s0 + $0xf8] sm:$0xff]
  %v103 = vld [vmem:[%s1] sm:$0xff]
  %v104 = vld [vmem:[%s1 + $0x8] sm:$0xff]
  %v105 = vld [vmem:[%s1 + $0x10] sm:$0xff]
  %v106 = vld [vmem:[%s1 + $0x18] sm:$0xff]
  %v107 = vld [vmem:[%s1 + $0x20] sm:$0xff]
  %v108 = vld [vmem:[%s1 + $0x28] sm:$0xff]
  %v109 = vld [vmem:[%s1 + $0x30] sm:$0xff]
  %v110 = vld [vmem:[%s1 + $0x38] sm:$0xff]
  %v111 = vld [vmem:[%s1 + $0x40] sm:$0xff]
  %v112 = vld [vmem:[%s1 + $0x48] sm:$0xff]
  %v113 = vld [vmem:[%s1 + $0x50] sm:$0xff]
  %v114 = vld [vmem:[%s1 + $0x58] sm:$0xff]
  %v115 = vld [vmem:[%s1 + $0x60] sm:$0xff]
  %v116 = vld [vmem:[%s1 + $0x68] sm:$0xff]
  %v117 = vld [vmem:[%s1 + $0x70] sm:$0xff]
  %v118 = vld [vmem:[%s1 + $0x78] sm:$0xff]
  %v119 = vld [vmem:[%s1 + $0x80] sm:$0xff]
  %v120 = vld [vmem:[%s1 + $0x88] sm:$0xff]
  %v121 = vld [vmem:[%s1 + $0x90] sm:$0xff]
  %v122 = vld [vmem:[%s1 + $0x98] sm:$0xff]
  %v123 = vld [vmem:[%s1 + $0xa0] sm:$0xff]
  %v124 = vld [vmem:[%s1 + $0xa8] sm:$0xff]
  %v125 = vld [vmem:[%s1 + $0xb0] sm:$0xff]
  %v126 = vld [vmem:[%s1 + $0xb8] sm:$0xff]
  %v127 = vld [vmem:[%s1 + $0xc0] sm:$0xff]
  %v128 = vld [vmem:[%s1 + $0xc8] sm:$0xff]
  %v129 = vld [vmem:[%s1 + $0xd0] sm:$0xff]
  %v130 = vld [vmem:[%s1 + $0xd8] sm:$0xff]
  %v131 = vld [vmem:[%s1 + $0xe0] sm:$0xff]
  %v132 = vld [vmem:[%s1 + $0xe8] sm:$0xff]
  %v133 = vld [vmem:[%s1 + $0xf0] sm:$0xff]
  %v134 = vld [vmem:[%s1 + $0xf8] sm:$0xff]
  %135 = vmatprep.subr.mxu0 0.0
  %136 = vmatpush1.msra.mxu0 %v118
  %137 = vmatprep.subr.mxu0 0.0
  %138 = vmatpush1.msra.mxu0 %v117
  %139 = vmatprep.subr.mxu0 0.0
  %140 = vmatpush1.msra.mxu0 %v116
  %141 = vmatprep.subr.mxu0 0.0
  %142 = vmatpush1.msra.mxu0 %v115
  %143 = vmatprep.subr.mxu0 0.0
  %144 = vmatpush1.msra.mxu0 %v114
  %145 = vmatprep.subr.mxu0 0.0
  %146 = vmatpush1.msra.mxu0 %v113
  %147 = vmatprep.subr.mxu0 0.0
  %148 = vmatpush1.msra.mxu0 %v112
  %149 = vmatprep.subr.mxu0 0.0
  %150 = vmatpush1.msra.mxu0 %v111
  %151 = vmatprep.subr.mxu0 0.0
  %152 = vmatpush1.msra.mxu0 %v110
  %153 = vmatprep.subr.mxu0 0.0
  %154 = vmatpush1.msra.mxu0 %v109
  %155 = vmatprep.subr.mxu0 0.0
  %156 = vmatpush1.msra.mxu0 %v108
  %157 = vmatprep.subr.mxu0 0.0
  %158 = vmatpush1.msra.mxu0 %v107
  %159 = vmatprep.subr.mxu0 0.0
  %160 = vmatpush1.msra.mxu0 %v106
  %161 = vmatprep.subr.mxu0 0.0
  %162 = vmatpush1.msra.mxu0 %v105
  %163 = vmatprep.subr.mxu0 0.0
  %164 = vmatpush1.msra.mxu0 %v104
  %165 = vmatprep.subr.mxu0 0.0
  %166 = vmatpush1.msra.mxu0 %v103
  %167 = vmatprep.subr.mxu0 0.0
  %168 = vmatpush2.msra.mxu0 %v134
  %169 = vmatprep.subr.mxu0 0.0
  %170 = vmatpush2.msra.mxu0 %v133
  %171 = vmatprep.subr.mxu0 0.0
  %172 = vmatpush2.msra.mxu0 %v132
  %173 = vmatprep.subr.mxu0 0.0
  %174 = vmatpush2.msra.mxu0 %v131
  %175 = vmatprep.subr.mxu0 0.0
  %176 = vmatpush2.msra.mxu0 %v130
  %177 = vmatprep.subr.mxu0 0.0
  %178 = vmatpush2.msra.mxu0 %v129
  %179 = vmatprep.subr.mxu0 0.0
  %180 = vmatpush2.msra.mxu0 %v128
  %181 = vmatprep.subr.mxu0 0.0
  %182 = vmatpush2.msra.mxu0 %v127
  %183 = vmatprep.subr.mxu0 0.0
  %184 = vmatpush2.msra.mxu0 %v126
  %185 = vmatprep.subr.mxu0 0.0
  %186 = vmatpush2.msra.mxu0 %v125
  %187 = vmatprep.subr.mxu0 0.0
  %188 = vmatpush2.msra.mxu0 %v124
  %189 = vmatprep.subr.mxu0 0.0
  %190 = vmatpush2.msra.mxu0 %v123
  %191 = vmatprep.subr.mxu0 0.0
  %192 = vmatpush2.msra.mxu0 %v122
  %193 = vmatprep.subr.mxu0 0.0
  %194 = vmatpush2.msra.mxu0 %v121
  %195 = vmatprep.subr.mxu0 0.0
  %196 = vmatpush2.msra.mxu0 %v120
  %197 = vmatprep.subr.mxu0 0.0
  %198 = vmatpush2.msra.mxu0 %v119
  %199 = vmatprep.mubr.f32.mxu0 %v72
  %200 = vmatmul.mubr.f32.gmra.mxu0 %v71
  %v201 = vpop.f32.mrf.mxu0
  %v202 = vadd.f32 0.0, %v201
  %v203 = vpop.f32.mrf.mxu0
  %204 = vmatprep.mubr.f32.mxu0 %v74
  %205 = vmatmul.mubr.f32.gmra.mxu0 %v73
  %v206 = vpop.f32.mrf.mxu0
  %v207 = vadd.f32 0.0, %v206
  %v208 = vpop.f32.mrf.mxu0
  %209 = vmatprep.mubr.f32.mxu0 %v76
  %210 = vmatmul.mubr.f32.gmra.mxu0 %v75
  %v211 = vpop.f32.mrf.mxu0
  %v212 = vadd.f32 0.0, %v211
  %v213 = vpop.f32.mrf.mxu0
  %214 = vmatprep.mubr.f32.mxu0 %v78
  %215 = vmatmul.mubr.f32.gmra.mxu0 %v77
  %v216 = vpop.f32.mrf.mxu0
  %v217 = vadd.f32 0.0, %v216
  %v218 = vpop.f32.mrf.mxu0
  %219 = vmatprep.mubr.f32.mxu0 %v80
  %220 = vmatmul.mubr.f32.gmra.mxu0 %v79
  %v221 = vpop.f32.mrf.mxu0
  %v222 = vadd.f32 0.0, %v221
  %v223 = vpop.f32.mrf.mxu0
  %224 = vmatprep.mubr.f32.mxu0 %v82
  %225 = vmatmul.mubr.f32.gmra.mxu0 %v81
  %v226 = vpop.f32.mrf.mxu0
  %v227 = vadd.f32 0.0, %v226
  %v228 = vpop.f32.mrf.mxu0
  %229 = vmatprep.mubr.f32.mxu0 %v84
  %230 = vmatmul.mubr.f32.gmra.mxu0 %v83
  %v231 = vpop.f32.mrf.mxu0
  %v232 = vadd.f32 0.0, %v231
  %v233 = vpop.f32.mrf.mxu0
  %234 = vmatprep.mubr.f32.mxu0 %v86
  %235 = vmatmul.mubr.f32.gmra.mxu0 %v85
  %v236 = vpop.f32.mrf.mxu0
  %v237 = vadd.f32 0.0, %v236
  %v238 = vpop.f32.mrf.mxu0
  %239 = vmatprep.mubr.f32.mxu0 %v88
  %240 = vmatmul.mubr.f32.gmra.mxu0 %v87
  %v241 = vpop.f32.mrf.mxu0
  %v242 = vadd.f32 0.0, %v241
  %v243 = vpop.f32.mrf.mxu0
  %244 = vmatprep.mubr.f32.mxu0 %v90
  %245 = vmatmul.mubr.f32.gmra.mxu0 %v89
  %v246 = vpop.f32.mrf.mxu0
  %v247 = vadd.f32 0.0, %v246
  %v248 = vpop.f32.mrf.mxu0
  %249 = vmatprep.mubr.f32.mxu0 %v92
  %250 = vmatmul.mubr.f32.gmra.mxu0 %v91
  %v251 = vpop.f32.mrf.mxu0
  %v252 = vadd.f32 0.0, %v251
  %v253 = vpop.f32.mrf.mxu0
  %254 = vmatprep.mubr.f32.mxu0 %v94
  %255 = vmatmul.mubr.f32.gmra.mxu0 %v93
  %v256 = vpop.f32.mrf.mxu0
  %v257 = vadd.f32 0.0, %v256
  %v258 = vpop.f32.mrf.mxu0
  %259 = vmatprep.mubr.f32.mxu0 %v96
  %260 = vmatmul.mubr.f32.gmra.mxu0 %v95
  %v261 = vpop.f32.mrf.mxu0
  %v262 = vadd.f32 0.0, %v261
  %v263 = vpop.f32.mrf.mxu0
  %264 = vmatprep.mubr.f32.mxu0 %v98
  %265 = vmatmul.mubr.f32.gmra.mxu0 %v97
  %v266 = vpop.f32.mrf.mxu0
  %v267 = vadd.f32 0.0, %v266
  %v268 = vpop.f32.mrf.mxu0
  %269 = vmatprep.mubr.f32.mxu0 %v100
  %270 = vmatmul.mubr.f32.gmra.mxu0 %v99
  %v271 = vpop.f32.mrf.mxu0
  %v272 = vadd.f32 0.0, %v271
  %v273 = vpop.f32.mrf.mxu0
  %274 = vmatprep.mubr.f32.mxu0 %v102
  %275 = vmatmul.mubr.f32.gmra.mxu0 %v101
  %v276 = vpop.f32.mrf.mxu0
  %v277 = vadd.f32 0.0, %v276
  %v278 = vpop.f32.mrf.mxu0
  %279 = vdwg.mxu0
  %v280 = vadd.f32 %v55, %v202
  %v281 = vadd.f32 %v56, %v207
  %v282 = vadd.f32 %v57, %v212
  %v283 = vadd.f32 %v58, %v217
  %v284 = vadd.f32 %v59, %v222
  %v285 = vadd.f32 %v60, %v227
  %v286 = vadd.f32 %v61, %v232
  %v287 = vadd.f32 %v62, %v237
  %v288 = vadd.f32 %v63, %v242
  %v289 = vadd.f32 %v64, %v247
  %v290 = vadd.f32 %v65, %v252
  %v291 = vadd.f32 %v66, %v257
  %v292 = vadd.f32 %v67, %v262
  %v293 = vadd.f32 %v68, %v267
  %v294 = vadd.f32 %v69, %v272
  %v295 = vadd.f32 %v70, %v277
  %296 = vst [vmem:[#allocation2] sm:$0xff] %v280
  %297 = vst [vmem:[#allocation2 + $0x8] sm:$0xff] %v281
  %298 = vst [vmem:[#allocation2 + $0x10] sm:$0xff] %v282
  %299 = vst [vmem:[#allocation2 + $0x18] sm:$0xff] %v283
  %300 = vst [vmem:[#allocation2 + $0x20] sm:$0xff] %v284
  %301 = vst [vmem:[#allocation2 + $0x28] sm:$0xff] %v285
  %302 = vst [vmem:[#allocation2 + $0x30] sm:$0xff] %v286
  %303 = vst [vmem:[#allocation2 + $0x38] sm:$0xff] %v287
  %304 = vst [vmem:[#allocation2 + $0x40] sm:$0xff] %v288
  %305 = vst [vmem:[#allocation2 + $0x48] sm:$0xff] %v289
  %306 = vst [vmem:[#allocation2 + $0x50] sm:$0xff] %v290
  %307 = vst [vmem:[#allocation2 + $0x58] sm:$0xff] %v291
  %308 = vst [vmem:[#allocation2 + $0x60] sm:$0xff] %v292
  %309 = vst [vmem:[#allocation2 + $0x68] sm:$0xff] %v293
  %310 = vst [vmem:[#allocation2 + $0x70] sm:$0xff] %v294
  %311 = vst [vmem:[#allocation2 + $0x78] sm:$0xff] %v295
  // Predicated region
  $region46: #{vae_forward.1} parent=0 // pred_check
    %p312 = pneg %p35
  $region47: #{vae_forward.1} parent=0 // pred_check_branch
    %314 = sbr.rel (%p312) target = $region49
  $region48: #{vae_forward.1} parent=0 // pred_region
    %v315 = vld [vmem:[#allocation2] sm:$0xff]
    %v316 = vld [vmem:[#allocation2 + $0x8] sm:$0xff]
    %v317 = vld [vmem:[#allocation2 + $0x10] sm:$0xff]
    %v318 = vld [vmem:[#allocation2 + $0x18] sm:$0xff]
    %v319 = vld [vmem:[#allocation2 + $0x20] sm:$0xff]
    %v320 = vld [vmem:[#allocation2 + $0x28] sm:$0xff]
    %v321 = vld [vmem:[#allocation2 + $0x30] sm:$0xff]
    %v322 = vld [vmem:[#allocation2 + $0x38] sm:$0xff]
    %v323 = vld [vmem:[#allocation2 + $0x40] sm:$0xff]
    %v324 = vld [vmem:[#allocation2 + $0x48] sm:$0xff]
    %v325 = vld [vmem:[#allocation2 + $0x50] sm:$0xff]
    %v326 = vld [vmem:[#allocation2 + $0x58] sm:$0xff]
    %v327 = vld [vmem:[#allocation2 + $0x60] sm:$0xff]
    %v328 = vld [vmem:[#allocation2 + $0x68] sm:$0xff]
    %v329 = vld [vmem:[#allocation2 + $0x70] sm:$0xff]
    %v330 = vld [vmem:[#allocation2 + $0x78] sm:$0xff]
    %v331 = vld [vmem:[%s2] sm:$0x1]
    %v333 = vlaneseq
    %v334 = vshrl.u32 %v333, 7
    %v335 = vsub.s32 0, %v334
    %v336 = vrot.slane %v331, %v335
    %v338 = vadd.f32 %v315, %v336
    %v339 = vadd.f32 %v316, %v336
    %v340 = vadd.f32 %v317, %v336
    %v341 = vadd.f32 %v318, %v336
    %v342 = vadd.f32 %v319, %v336
    %v343 = vadd.f32 %v320, %v336
    %v344 = vadd.f32 %v321, %v336
    %v345 = vadd.f32 %v322, %v336
    %v346 = vadd.f32 %v323, %v336
    %v347 = vadd.f32 %v324, %v336
    %v348 = vadd.f32 %v325, %v336
    %v349 = vadd.f32 %v326, %v336
    %v350 = vadd.f32 %v327, %v336
    %v351 = vadd.f32 %v328, %v336
    %v352 = vadd.f32 %v329, %v336
    %v353 = vadd.f32 %v330, %v336
    %v354 = vmax.f32 %v338, 0.0
    %v355 = vmax.f32 %v339, 0.0
    %v356 = vmax.f32 %v340, 0.0
    %v357 = vmax.f32 %v341, 0.0
    %v358 = vmax.f32 %v342, 0.0
    %v359 = vmax.f32 %v343, 0.0
    %v360 = vmax.f32 %v344, 0.0
    %v361 = vmax.f32 %v345, 0.0
    %v362 = vmax.f32 %v346, 0.0
    %v363 = vmax.f32 %v347, 0.0
    %v364 = vmax.f32 %v348, 0.0
    %v365 = vmax.f32 %v349, 0.0
    %v366 = vmax.f32 %v350, 0.0
    %v367 = vmax.f32 %v351, 0.0
    %v368 = vmax.f32 %v352, 0.0
    %v369 = vmax.f32 %v353, 0.0
    %v370 = vld [vmem:[%s3] sm:$0xff]
    %v371 = vld [vmem:[%s3 + $0x8] sm:$0xff]
    %v372 = vld [vmem:[%s3 + $0x10] sm:$0xff]
    %v373 = vld [vmem:[%s3 + $0x18] sm:$0xff]
    %v374 = vld [vmem:[%s3 + $0x20] sm:$0xff]
    %v375 = vld [vmem:[%s3 + $0x28] sm:$0xff]
    %v376 = vld [vmem:[%s3 + $0x30] sm:$0xff]
    %v377 = vld [vmem:[%s3 + $0x38] sm:$0xff]
    %v378 = vld [vmem:[%s3 + $0x40] sm:$0xff]
    %v379 = vld [vmem:[%s3 + $0x48] sm:$0xff]
    %v380 = vld [vmem:[%s3 + $0x50] sm:$0xff]
    %v381 = vld [vmem:[%s3 + $0x58] sm:$0xff]
    %v382 = vld [vmem:[%s3 + $0x60] sm:$0xff]
    %v383 = vld [vmem:[%s3 + $0x68] sm:$0xff]
    %v384 = vld [vmem:[%s3 + $0x70] sm:$0xff]
    %v385 = vld [vmem:[%s3 + $0x78] sm:$0xff]
    %v386 = vld [vmem:[%s4] sm:$0x1]
    %v388 = vlaneseq
    %v389 = vshrl.u32 %v388, 7
    %v390 = vsub.s32 0, %v389
    %v391 = vrot.slane %v386, %v390
    %393 = vmatprep.subr.mxu0 0.0
    %394 = vmatpush1.msra.mxu0 %v385
    %395 = vmatprep.subr.mxu0 0.0
    %396 = vmatpush1.msra.mxu0 %v384
    %397 = vmatprep.subr.mxu0 0.0
    %398 = vmatpush1.msra.mxu0 %v383
    %399 = vmatprep.subr.mxu0 0.0
    %400 = vmatpush1.msra.mxu0 %v382
    %401 = vmatprep.subr.mxu0 0.0
    %402 = vmatpush1.msra.mxu0 %v381
    %403 = vmatprep.subr.mxu0 0.0
    %404 = vmatpush1.msra.mxu0 %v380
    %405 = vmatprep.subr.mxu0 0.0
    %406 = vmatpush1.msra.mxu0 %v379
    %407 = vmatprep.subr.mxu0 0.0
    %408 = vmatpush1.msra.mxu0 %v378
    %409 = vmatprep.subr.mxu0 0.0
    %410 = vmatpush1.msra.mxu0 %v377
    %411 = vmatprep.subr.mxu0 0.0
    %412 = vmatpush1.msra.mxu0 %v376
    %413 = vmatprep.subr.mxu0 0.0
    %414 = vmatpush1.msra.mxu0 %v375
    %415 = vmatprep.subr.mxu0 0.0
    %416 = vmatpush1.msra.mxu0 %v374
    %417 = vmatprep.subr.mxu0 0.0
    %418 = vmatpush1.msra.mxu0 %v373
    %419 = vmatprep.subr.mxu0 0.0
    %420 = vmatpush1.msra.mxu0 %v372
    %421 = vmatprep.subr.mxu0 0.0
    %422 = vmatpush1.msra.mxu0 %v371
    %423 = vmatprep.subr.mxu0 0.0
    %424 = vmatpush1.msra.mxu0 %v370
    %425 = vmatprep.subr.mxu0 0.0
    %426 = vmatpush2.msra.mxu0 0.0
    %427 = vmatprep.subr.mxu0 0.0
    %428 = vmatpush2.msra.mxu0 0.0
    %429 = vmatprep.subr.mxu0 0.0
    %430 = vmatpush2.msra.mxu0 0.0
    %431 = vmatprep.subr.mxu0 0.0
    %432 = vmatpush2.msra.mxu0 0.0
    %433 = vmatprep.subr.mxu0 0.0
    %434 = vmatpush2.msra.mxu0 0.0
    %435 = vmatprep.subr.mxu0 0.0
    %436 = vmatpush2.msra.mxu0 0.0
    %437 = vmatprep.subr.mxu0 0.0
    %438 = vmatpush2.msra.mxu0 0.0
    %439 = vmatprep.subr.mxu0 0.0
    %440 = vmatpush2.msra.mxu0 0.0
    %441 = vmatprep.subr.mxu0 0.0
    %442 = vmatpush2.msra.mxu0 0.0
    %443 = vmatprep.subr.mxu0 0.0
    %444 = vmatpush2.msra.mxu0 0.0
    %445 = vmatprep.subr.mxu0 0.0
    %446 = vmatpush2.msra.mxu0 0.0
    %447 = vmatprep.subr.mxu0 0.0
    %448 = vmatpush2.msra.mxu0 0.0
    %449 = vmatprep.subr.mxu0 0.0
    %450 = vmatpush2.msra.mxu0 0.0
    %451 = vmatprep.subr.mxu0 0.0
    %452 = vmatpush2.msra.mxu0 0.0
    %453 = vmatprep.subr.mxu0 0.0
    %454 = vmatpush2.msra.mxu0 0.0
    %455 = vmatprep.subr.mxu0 0.0
    %456 = vmatpush2.msra.mxu0 0.0
    %457 = vmatprep.mubr.f32.mxu0 0.0
    %458 = vmatmul.mubr.f32.gmra.mxu0 %v354
    %v459 = vpop.f32.mrf.mxu0
    %v460 = vadd.f32 %v391, %v459
    %v461 = vpop.f32.mrf.mxu0
    %462 = vmatprep.mubr.f32.mxu0 0.0
    %463 = vmatmul.mubr.f32.gmra.mxu0 %v355
    %v464 = vpop.f32.mrf.mxu0
    %v465 = vadd.f32 %v391, %v464
    %v466 = vpop.f32.mrf.mxu0
    %467 = vmatprep.mubr.f32.mxu0 0.0
    %468 = vmatmul.mubr.f32.gmra.mxu0 %v356
    %v469 = vpop.f32.mrf.mxu0
    %v470 = vadd.f32 %v391, %v469
    %v471 = vpop.f32.mrf.mxu0
    %472 = vmatprep.mubr.f32.mxu0 0.0
    %473 = vmatmul.mubr.f32.gmra.mxu0 %v357
    %v474 = vpop.f32.mrf.mxu0
    %v475 = vadd.f32 %v391, %v474
    %v476 = vpop.f32.mrf.mxu0
    %477 = vmatprep.mubr.f32.mxu0 0.0
    %478 = vmatmul.mubr.f32.gmra.mxu0 %v358
    %v479 = vpop.f32.mrf.mxu0
    %v480 = vadd.f32 %v391, %v479
    %v481 = vpop.f32.mrf.mxu0
    %482 = vmatprep.mubr.f32.mxu0 0.0
    %483 = vmatmul.mubr.f32.gmra.mxu0 %v359
    %v484 = vpop.f32.mrf.mxu0
    %v485 = vadd.f32 %v391, %v484
    %v486 = vpop.f32.mrf.mxu0
    %487 = vmatprep.mubr.f32.mxu0 0.0
    %488 = vmatmul.mubr.f32.gmra.mxu0 %v360
    %v489 = vpop.f32.mrf.mxu0
    %v490 = vadd.f32 %v391, %v489
    %v491 = vpop.f32.mrf.mxu0
    %492 = vmatprep.mubr.f32.mxu0 0.0
    %493 = vmatmul.mubr.f32.gmra.mxu0 %v361
    %v494 = vpop.f32.mrf.mxu0
    %v495 = vadd.f32 %v391, %v494
    %v496 = vpop.f32.mrf.mxu0
    %497 = vmatprep.mubr.f32.mxu0 0.0
    %498 = vmatmul.mubr.f32.gmra.mxu0 %v362
    %v499 = vpop.f32.mrf.mxu0
    %v500 = vadd.f32 %v391, %v499
    %v501 = vpop.f32.mrf.mxu0
    %502 = vmatprep.mubr.f32.mxu0 0.0
    %503 = vmatmul.mubr.f32.gmra.mxu0 %v363
    %v504 = vpop.f32.mrf.mxu0
    %v505 = vadd.f32 %v391, %v504
    %v506 = vpop.f32.mrf.mxu0
    %507 = vmatprep.mubr.f32.mxu0 0.0
    %508 = vmatmul.mubr.f32.gmra.mxu0 %v364
    %v509 = vpop.f32.mrf.mxu0
    %v510 = vadd.f32 %v391, %v509
    %v511 = vpop.f32.mrf.mxu0
    %512 = vmatprep.mubr.f32.mxu0 0.0
    %513 = vmatmul.mubr.f32.gmra.mxu0 %v365
    %v514 = vpop.f32.mrf.mxu0
    %v515 = vadd.f32 %v391, %v514
    %v516 = vpop.f32.mrf.mxu0
    %517 = vmatprep.mubr.f32.mxu0 0.0
    %518 = vmatmul.mubr.f32.gmra.mxu0 %v366
    %v519 = vpop.f32.mrf.mxu0
    %v520 = vadd.f32 %v391, %v519
    %v521 = vpop.f32.mrf.mxu0
    %522 = vmatprep.mubr.f32.mxu0 0.0
    %523 = vmatmul.mubr.f32.gmra.mxu0 %v367
    %v524 = vpop.f32.mrf.mxu0
    %v525 = vadd.f32 %v391, %v524
    %v526 = vpop.f32.mrf.mxu0
    %527 = vmatprep.mubr.f32.mxu0 0.0
    %528 = vmatmul.mubr.f32.gmra.mxu0 %v368
    %v529 = vpop.f32.mrf.mxu0
    %v530 = vadd.f32 %v391, %v529
    %v531 = vpop.f32.mrf.mxu0
    %532 = vmatprep.mubr.f32.mxu0 0.0
    %533 = vmatmul.mubr.f32.gmra.mxu0 %v369
    %v534 = vpop.f32.mrf.mxu0
    %v535 = vadd.f32 %v391, %v534
    %v536 = vpop.f32.mrf.mxu0
    %537 = vdwg.mxu0
    %v538 = vmul.f32 %v460, 1.442695
    %v539 = vpow.pop %v538
    %v540 = vmul.f32 %v465, 1.442695
    %v541 = vpow.pop %v540
    %v542 = vmul.f32 %v470, 1.442695
    %v543 = vpow.pop %v542
    %v544 = vmul.f32 %v475, 1.442695
    %v545 = vpow.pop %v544
    %v546 = vmul.f32 %v480, 1.442695
    %v547 = vpow.pop %v546
    %v548 = vmul.f32 %v485, 1.442695
    %v549 = vpow.pop %v548
    %v550 = vmul.f32 %v490, 1.442695
    %v551 = vpow.pop %v550
    %v552 = vmul.f32 %v495, 1.442695
    %v553 = vpow.pop %v552
    %v554 = vmul.f32 %v500, 1.442695
    %v555 = vpow.pop %v554
    %v556 = vmul.f32 %v505, 1.442695
    %v557 = vpow.pop %v556
    %v558 = vmul.f32 %v510, 1.442695
    %v559 = vpow.pop %v558
    %v560 = vmul.f32 %v515, 1.442695
    %v561 = vpow.pop %v560
    %v562 = vmul.f32 %v520, 1.442695
    %v563 = vpow.pop %v562
    %v564 = vmul.f32 %v525, 1.442695
    %v565 = vpow.pop %v564
    %v566 = vmul.f32 %v530, 1.442695
    %v567 = vpow.pop %v566
    %v568 = vmul.f32 %v535, 1.442695
    %v569 = vpow.pop %v568
    %v570 = vld [vmem:[%s5] sm:$0xff]
    %v571 = vld [vmem:[%s5 + $0x8] sm:$0xff]
    %v572 = vld [vmem:[%s5 + $0x10] sm:$0xff]
    %v573 = vld [vmem:[%s5 + $0x18] sm:$0xff]
    %v574 = vld [vmem:[%s5 + $0x20] sm:$0xff]
    %v575 = vld [vmem:[%s5 + $0x28] sm:$0xff]
    %v576 = vld [vmem:[%s5 + $0x30] sm:$0xff]
    %v577 = vld [vmem:[%s5 + $0x38] sm:$0xff]
    %v578 = vld [vmem:[%s5 + $0x40] sm:$0xff]
    %v579 = vld [vmem:[%s5 + $0x48] sm:$0xff]
    %v580 = vld [vmem:[%s5 + $0x50] sm:$0xff]
    %v581 = vld [vmem:[%s5 + $0x58] sm:$0xff]
    %v582 = vld [vmem:[%s5 + $0x60] sm:$0xff]
    %v583 = vld [vmem:[%s5 + $0x68] sm:$0xff]
    %v584 = vld [vmem:[%s5 + $0x70] sm:$0xff]
    %v585 = vld [vmem:[%s5 + $0x78] sm:$0xff]
    %602 = vrot.lane.b32.xlu0 %v570, 16
    %v603 = vpop.permute.xlu0 %602
    %604 = vrot.lane.b32.xlu0 %v571, 16
    %v605 = vpop.permute.xlu0 %604
    %606 = vrot.lane.b32.xlu0 %v572, 16
    %v607 = vpop.permute.xlu0 %606
    %608 = vrot.lane.b32.xlu0 %v573, 16
    %v609 = vpop.permute.xlu0 %608
    %610 = vrot.lane.b32.xlu0 %v574, 16
    %v611 = vpop.permute.xlu0 %610
    %612 = vrot.lane.b32.xlu0 %v575, 16
    %v613 = vpop.permute.xlu0 %612
    %614 = vrot.lane.b32.xlu0 %v576, 16
    %v615 = vpop.permute.xlu0 %614
    %616 = vrot.lane.b32.xlu0 %v577, 16
    %v617 = vpop.permute.xlu0 %616
    %618 = vrot.lane.b32.xlu0 %v578, 16
    %v619 = vpop.permute.xlu0 %618
    %620 = vrot.lane.b32.xlu0 %v579, 16
    %v621 = vpop.permute.xlu0 %620
    %622 = vrot.lane.b32.xlu0 %v580, 16
    %v623 = vpop.permute.xlu0 %622
    %624 = vrot.lane.b32.xlu0 %v581, 16
    %v625 = vpop.permute.xlu0 %624
    %626 = vrot.lane.b32.xlu0 %v582, 16
    %v627 = vpop.permute.xlu0 %626
    %628 = vrot.lane.b32.xlu0 %v583, 16
    %v629 = vpop.permute.xlu0 %628
    %630 = vrot.lane.b32.xlu0 %v584, 16
    %v631 = vpop.permute.xlu0 %630
    %632 = vrot.lane.b32.xlu0 %v585, 16
    %v633 = vpop.permute.xlu0 %632
    %v650 = vmul.f32 %v539, %v603
    %v651 = vmul.f32 %v541, %v605
    %v652 = vmul.f32 %v543, %v607
    %v653 = vmul.f32 %v545, %v609
    %v654 = vmul.f32 %v547, %v611
    %v655 = vmul.f32 %v549, %v613
    %v656 = vmul.f32 %v551, %v615
    %v657 = vmul.f32 %v553, %v617
    %v658 = vmul.f32 %v555, %v619
    %v659 = vmul.f32 %v557, %v621
    %v660 = vmul.f32 %v559, %v623
    %v661 = vmul.f32 %v561, %v625
    %v662 = vmul.f32 %v563, %v627
    %v663 = vmul.f32 %v565, %v629
    %v664 = vmul.f32 %v567, %v631
    %v665 = vmul.f32 %v569, %v633
    %682 = vrot.lane.b32.xlu0 %v650, 112
    %v683 = vpop.permute.xlu0 %682
    %684 = vrot.lane.b32.xlu0 %v651, 112
    %v685 = vpop.permute.xlu0 %684
    %686 = vrot.lane.b32.xlu0 %v652, 112
    %v687 = vpop.permute.xlu0 %686
    %688 = vrot.lane.b32.xlu0 %v653, 112
    %v689 = vpop.permute.xlu0 %688
    %690 = vrot.lane.b32.xlu0 %v654, 112
    %v691 = vpop.permute.xlu0 %690
    %692 = vrot.lane.b32.xlu0 %v655, 112
    %v693 = vpop.permute.xlu0 %692
    %694 = vrot.lane.b32.xlu0 %v656, 112
    %v695 = vpop.permute.xlu0 %694
    %696 = vrot.lane.b32.xlu0 %v657, 112
    %v697 = vpop.permute.xlu0 %696
    %698 = vrot.lane.b32.xlu0 %v658, 112
    %v699 = vpop.permute.xlu0 %698
    %700 = vrot.lane.b32.xlu0 %v659, 112
    %v701 = vpop.permute.xlu0 %700
    %702 = vrot.lane.b32.xlu0 %v660, 112
    %v703 = vpop.permute.xlu0 %702
    %704 = vrot.lane.b32.xlu0 %v661, 112
    %v705 = vpop.permute.xlu0 %704
    %706 = vrot.lane.b32.xlu0 %v662, 112
    %v707 = vpop.permute.xlu0 %706
    %708 = vrot.lane.b32.xlu0 %v663, 112
    %v709 = vpop.permute.xlu0 %708
    %710 = vrot.lane.b32.xlu0 %v664, 112
    %v711 = vpop.permute.xlu0 %710
    %712 = vrot.lane.b32.xlu0 %v665, 112
    %v713 = vpop.permute.xlu0 %712
    %v730 = vadd.f32 %v460, %v683
    %v731 = vadd.f32 %v465, %v685
    %v732 = vadd.f32 %v470, %v687
    %v733 = vadd.f32 %v475, %v689
    %v734 = vadd.f32 %v480, %v691
    %v735 = vadd.f32 %v485, %v693
    %v736 = vadd.f32 %v490, %v695
    %v737 = vadd.f32 %v495, %v697
    %v738 = vadd.f32 %v500, %v699
    %v739 = vadd.f32 %v505, %v701
    %v740 = vadd.f32 %v510, %v703
    %v741 = vadd.f32 %v515, %v705
    %v742 = vadd.f32 %v520, %v707
    %v743 = vadd.f32 %v525, %v709
    %v744 = vadd.f32 %v530, %v711
    %v745 = vadd.f32 %v535, %v713
    %v746 = vld [vmem:[%s6] sm:$0xff]
    %v747 = vld [vmem:[%s6 + $0x8] sm:$0xff]
    %v748 = vld [vmem:[%s7] sm:$0x1]
    %v750 = vlaneseq
    %v751 = vshrl.u32 %v750, 7
    %v752 = vsub.s32 0, %v751
    %v753 = vrot.slane %v748, %v752
    %vm755 = vcmask 130048
    %v757 = vsel %vm755, %v730, 0
    %v760 = vsel %vm755, %v731, 0
    %v763 = vsel %vm755, %v732, 0
    %v766 = vsel %vm755, %v733, 0
    %v769 = vsel %vm755, %v734, 0
    %v772 = vsel %vm755, %v735, 0
    %v775 = vsel %vm755, %v736, 0
    %v778 = vsel %vm755, %v737, 0
    %v781 = vsel %vm755, %v738, 0
    %v784 = vsel %vm755, %v739, 0
    %v787 = vsel %vm755, %v740, 0
    %v790 = vsel %vm755, %v741, 0
    %v793 = vsel %vm755, %v742, 0
    %v796 = vsel %vm755, %v743, 0
    %v799 = vsel %vm755, %v744, 0
    %v802 = vsel %vm755, %v745, 0
    %804 = vmatprep.subr.mxu0 0.0
    %805 = vmatpush1.msra.mxu0 0.0
    %806 = vmatprep.subr.mxu0 0.0
    %807 = vmatpush1.msra.mxu0 0.0
    %808 = vmatprep.subr.mxu0 0.0
    %809 = vmatpush1.msra.mxu0 0.0
    %810 = vmatprep.subr.mxu0 0.0
    %811 = vmatpush1.msra.mxu0 0.0
    %812 = vmatprep.subr.mxu0 0.0
    %813 = vmatpush1.msra.mxu0 0.0
    %814 = vmatprep.subr.mxu0 0.0
    %815 = vmatpush1.msra.mxu0 0.0
    %816 = vmatprep.subr.mxu0 0.0
    %817 = vmatpush1.msra.mxu0 0.0
    %818 = vmatprep.subr.mxu0 0.0
    %819 = vmatpush1.msra.mxu0 0.0
    %820 = vmatprep.subr.mxu0 0.0
    %821 = vmatpush1.msra.mxu0 0.0
    %822 = vmatprep.subr.mxu0 0.0
    %823 = vmatpush1.msra.mxu0 0.0
    %824 = vmatprep.subr.mxu0 0.0
    %825 = vmatpush1.msra.mxu0 0.0
    %826 = vmatprep.subr.mxu0 0.0
    %827 = vmatpush1.msra.mxu0 0.0
    %828 = vmatprep.subr.mxu0 0.0
    %829 = vmatpush1.msra.mxu0 0.0
    %830 = vmatprep.subr.mxu0 0.0
    %831 = vmatpush1.msra.mxu0 0.0
    %832 = vmatprep.subr.mxu0 0.0
    %833 = vmatpush1.msra.mxu0 %v747
    %834 = vmatprep.subr.mxu0 0.0
    %835 = vmatpush1.msra.mxu0 %v746
    %836 = vmatprep.subr.mxu0 0.0
    %837 = vmatpush2.msra.mxu0 0.0
    %838 = vmatprep.subr.mxu0 0.0
    %839 = vmatpush2.msra.mxu0 0.0
    %840 = vmatprep.subr.mxu0 0.0
    %841 = vmatpush2.msra.mxu0 0.0
    %842 = vmatprep.subr.mxu0 0.0
    %843 = vmatpush2.msra.mxu0 0.0
    %844 = vmatprep.subr.mxu0 0.0
    %845 = vmatpush2.msra.mxu0 0.0
    %846 = vmatprep.subr.mxu0 0.0
    %847 = vmatpush2.msra.mxu0 0.0
    %848 = vmatprep.subr.mxu0 0.0
    %849 = vmatpush2.msra.mxu0 0.0
    %850 = vmatprep.subr.mxu0 0.0
    %851 = vmatpush2.msra.mxu0 0.0
    %852 = vmatprep.subr.mxu0 0.0
    %853 = vmatpush2.msra.mxu0 0.0
    %854 = vmatprep.subr.mxu0 0.0
    %855 = vmatpush2.msra.mxu0 0.0
    %856 = vmatprep.subr.mxu0 0.0
    %857 = vmatpush2.msra.mxu0 0.0
    %858 = vmatprep.subr.mxu0 0.0
    %859 = vmatpush2.msra.mxu0 0.0
    %860 = vmatprep.subr.mxu0 0.0
    %861 = vmatpush2.msra.mxu0 0.0
    %862 = vmatprep.subr.mxu0 0.0
    %863 = vmatpush2.msra.mxu0 0.0
    %864 = vmatprep.subr.mxu0 0.0
    %865 = vmatpush2.msra.mxu0 0.0
    %866 = vmatprep.subr.mxu0 0.0
    %867 = vmatpush2.msra.mxu0 0.0
    %868 = vmatprep.mubr.f32.mxu0 0.0
    %869 = vmatmul.mubr.f32.gmra.mxu0 %v757
    %v870 = vpop.f32.mrf.mxu0
    %v871 = vadd.f32 %v753, %v870
    %v872 = vpop.f32.mrf.mxu0
    %873 = vmatprep.mubr.f32.mxu0 0.0
    %874 = vmatmul.mubr.f32.gmra.mxu0 %v760
    %v875 = vpop.f32.mrf.mxu0
    %v876 = vadd.f32 %v753, %v875
    %v877 = vpop.f32.mrf.mxu0
    %878 = vmatprep.mubr.f32.mxu0 0.0
    %879 = vmatmul.mubr.f32.gmra.mxu0 %v763
    %v880 = vpop.f32.mrf.mxu0
    %v881 = vadd.f32 %v753, %v880
    %v882 = vpop.f32.mrf.mxu0
    %883 = vmatprep.mubr.f32.mxu0 0.0
    %884 = vmatmul.mubr.f32.gmra.mxu0 %v766
    %v885 = vpop.f32.mrf.mxu0
    %v886 = vadd.f32 %v753, %v885
    %v887 = vpop.f32.mrf.mxu0
    %888 = vmatprep.mubr.f32.mxu0 0.0
    %889 = vmatmul.mubr.f32.gmra.mxu0 %v769
    %v890 = vpop.f32.mrf.mxu0
    %v891 = vadd.f32 %v753, %v890
    %v892 = vpop.f32.mrf.mxu0
    %893 = vmatprep.mubr.f32.mxu0 0.0
    %894 = vmatmul.mubr.f32.gmra.mxu0 %v772
    %v895 = vpop.f32.mrf.mxu0
    %v896 = vadd.f32 %v753, %v895
    %v897 = vpop.f32.mrf.mxu0
    %898 = vmatprep.mubr.f32.mxu0 0.0
    %899 = vmatmul.mubr.f32.gmra.mxu0 %v775
    %v900 = vpop.f32.mrf.mxu0
    %v901 = vadd.f32 %v753, %v900
    %v902 = vpop.f32.mrf.mxu0
    %903 = vmatprep.mubr.f32.mxu0 0.0
    %904 = vmatmul.mubr.f32.gmra.mxu0 %v778
    %v905 = vpop.f32.mrf.mxu0
    %v906 = vadd.f32 %v753, %v905
    %v907 = vpop.f32.mrf.mxu0
    %908 = vmatprep.mubr.f32.mxu0 0.0
    %909 = vmatmul.mubr.f32.gmra.mxu0 %v781
    %v910 = vpop.f32.mrf.mxu0
    %v911 = vadd.f32 %v753, %v910
    %v912 = vpop.f32.mrf.mxu0
    %913 = vmatprep.mubr.f32.mxu0 0.0
    %914 = vmatmul.mubr.f32.gmra.mxu0 %v784
    %v915 = vpop.f32.mrf.mxu0
    %v916 = vadd.f32 %v753, %v915
    %v917 = vpop.f32.mrf.mxu0
    %918 = vmatprep.mubr.f32.mxu0 0.0
    %919 = vmatmul.mubr.f32.gmra.mxu0 %v787
    %v920 = vpop.f32.mrf.mxu0
    %v921 = vadd.f32 %v753, %v920
    %v922 = vpop.f32.mrf.mxu0
    %923 = vmatprep.mubr.f32.mxu0 0.0
    %924 = vmatmul.mubr.f32.gmra.mxu0 %v790
    %v925 = vpop.f32.mrf.mxu0
    %v926 = vadd.f32 %v753, %v925
    %v927 = vpop.f32.mrf.mxu0
    %928 = vmatprep.mubr.f32.mxu0 0.0
    %929 = vmatmul.mubr.f32.gmra.mxu0 %v793
    %v930 = vpop.f32.mrf.mxu0
    %v931 = vadd.f32 %v753, %v930
    %v932 = vpop.f32.mrf.mxu0
    %933 = vmatprep.mubr.f32.mxu0 0.0
    %934 = vmatmul.mubr.f32.gmra.mxu0 %v796
    %v935 = vpop.f32.mrf.mxu0
    %v936 = vadd.f32 %v753, %v935
    %v937 = vpop.f32.mrf.mxu0
    %938 = vmatprep.mubr.f32.mxu0 0.0
    %939 = vmatmul.mubr.f32.gmra.mxu0 %v799
    %v940 = vpop.f32.mrf.mxu0
    %v941 = vadd.f32 %v753, %v940
    %v942 = vpop.f32.mrf.mxu0
    %943 = vmatprep.mubr.f32.mxu0 0.0
    %944 = vmatmul.mubr.f32.gmra.mxu0 %v802
    %v945 = vpop.f32.mrf.mxu0
    %v946 = vadd.f32 %v753, %v945
    %v947 = vpop.f32.mrf.mxu0
    %948 = vdwg.mxu0
    %v949 = vmax.f32 %v871, 0.0
    %v950 = vmax.f32 %v876, 0.0
    %v951 = vmax.f32 %v881, 0.0
    %v952 = vmax.f32 %v886, 0.0
    %v953 = vmax.f32 %v891, 0.0
    %v954 = vmax.f32 %v896, 0.0
    %v955 = vmax.f32 %v901, 0.0
    %v956 = vmax.f32 %v906, 0.0
    %v957 = vmax.f32 %v911, 0.0
    %v958 = vmax.f32 %v916, 0.0
    %v959 = vmax.f32 %v921, 0.0
    %v960 = vmax.f32 %v926, 0.0
    %v961 = vmax.f32 %v931, 0.0
    %v962 = vmax.f32 %v936, 0.0
    %v963 = vmax.f32 %v941, 0.0
    %v964 = vmax.f32 %v946, 0.0
    %v965 = vld [vmem:[%s8] sm:$0xff]
    %v966 = vld [vmem:[%s8 + $0x8] sm:$0xff]
    %v967 = vld [vmem:[%s9] sm:$0x3]
    %v969 = vlaneseq
    %v970 = vshrl.u32 %v969, 7
    %v971 = vsub.s32 0, %v970
    %v972 = vrot.slane %v967, %v971
    %v973 = vlaneseq
    %v974 = vshrl.u32 %v973, 7
    %v975 = vsub.s32 1, %v974
    %v976 = vrot.slane %v967, %v975
    %vm979 = vcmask 64512
    %v981 = vsel %vm979, %v949, 0
    %v984 = vsel %vm979, %v950, 0
    %v987 = vsel %vm979, %v951, 0
    %v990 = vsel %vm979, %v952, 0
    %v993 = vsel %vm979, %v953, 0
    %v996 = vsel %vm979, %v954, 0
    %v999 = vsel %vm979, %v955, 0
    %v1002 = vsel %vm979, %v956, 0
    %v1005 = vsel %vm979, %v957, 0
    %v1008 = vsel %vm979, %v958, 0
    %v1011 = vsel %vm979, %v959, 0
    %v1014 = vsel %vm979, %v960, 0
    %v1017 = vsel %vm979, %v961, 0
    %v1020 = vsel %vm979, %v962, 0
    %v1023 = vsel %vm979, %v963, 0
    %v1026 = vsel %vm979, %v964, 0
    %1028 = vmatprep.subr.mxu0 0.0
    %1029 = vmatpush1.msra.mxu0 0.0
    %1030 = vmatprep.subr.mxu0 0.0
    %1031 = vmatpush1.msra.mxu0 0.0
    %1032 = vmatprep.subr.mxu0 0.0
    %1033 = vmatpush1.msra.mxu0 0.0
    %1034 = vmatprep.subr.mxu0 0.0
    %1035 = vmatpush1.msra.mxu0 0.0
    %1036 = vmatprep.subr.mxu0 0.0
    %1037 = vmatpush1.msra.mxu0 0.0
    %1038 = vmatprep.subr.mxu0 0.0
    %1039 = vmatpush1.msra.mxu0 0.0
    %1040 = vmatprep.subr.mxu0 0.0
    %1041 = vmatpush1.msra.mxu0 0.0
    %1042 = vmatprep.subr.mxu0 0.0
    %1043 = vmatpush1.msra.mxu0 0.0
    %1044 = vmatprep.subr.mxu0 0.0
    %1045 = vmatpush1.msra.mxu0 0.0
    %1046 = vmatprep.subr.mxu0 0.0
    %1047 = vmatpush1.msra.mxu0 0.0
    %1048 = vmatprep.subr.mxu0 0.0
    %1049 = vmatpush1.msra.mxu0 0.0
    %1050 = vmatprep.subr.mxu0 0.0
    %1051 = vmatpush1.msra.mxu0 0.0
    %1052 = vmatprep.subr.mxu0 0.0
    %1053 = vmatpush1.msra.mxu0 0.0
    %1054 = vmatprep.subr.mxu0 0.0
    %1055 = vmatpush1.msra.mxu0 0.0
    %1056 = vmatprep.subr.mxu0 0.0
    %1057 = vmatpush1.msra.mxu0 0.0
    %1058 = vmatprep.subr.mxu0 %v966
    %1059 = vmatpush1.msra.mxu0 %v965
    %1060 = vmatprep.subr.mxu0 0.0
    %1061 = vmatpush2.msra.mxu0 0.0
    %1062 = vmatprep.subr.mxu0 0.0
    %1063 = vmatpush2.msra.mxu0 0.0
    %1064 = vmatprep.subr.mxu0 0.0
    %1065 = vmatpush2.msra.mxu0 0.0
    %1066 = vmatprep.subr.mxu0 0.0
    %1067 = vmatpush2.msra.mxu0 0.0
    %1068 = vmatprep.subr.mxu0 0.0
    %1069 = vmatpush2.msra.mxu0 0.0
    %1070 = vmatprep.subr.mxu0 0.0
    %1071 = vmatpush2.msra.mxu0 0.0
    %1072 = vmatprep.subr.mxu0 0.0
    %1073 = vmatpush2.msra.mxu0 0.0
    %1074 = vmatprep.subr.mxu0 0.0
    %1075 = vmatpush2.msra.mxu0 0.0
    %1076 = vmatprep.subr.mxu0 0.0
    %1077 = vmatpush2.msra.mxu0 0.0
    %1078 = vmatprep.subr.mxu0 0.0
    %1079 = vmatpush2.msra.mxu0 0.0
    %1080 = vmatprep.subr.mxu0 0.0
    %1081 = vmatpush2.msra.mxu0 0.0
    %1082 = vmatprep.subr.mxu0 0.0
    %1083 = vmatpush2.msra.mxu0 0.0
    %1084 = vmatprep.subr.mxu0 0.0
    %1085 = vmatpush2.msra.mxu0 0.0
    %1086 = vmatprep.subr.mxu0 0.0
    %1087 = vmatpush2.msra.mxu0 0.0
    %1088 = vmatprep.subr.mxu0 0.0
    %1089 = vmatpush2.msra.mxu0 0.0
    %1090 = vmatprep.subr.mxu0 0.0
    %1091 = vmatpush2.msra.mxu0 0.0
    %1092 = vmatprep.mubr.f32.mxu0 0.0
    %1093 = vmatmul.mubr.f32.gmra.mxu0 %v981
    %v1094 = vpop.f32.mrf.mxu0
    %v1095 = vadd.f32 %v972, %v1094
    %v1096 = vpop.f32.mrf.mxu0
    %v1097 = vadd.f32 %v976, %v1096
    %1098 = vmatprep.mubr.f32.mxu0 0.0
    %1099 = vmatmul.mubr.f32.gmra.mxu0 %v984
    %v1100 = vpop.f32.mrf.mxu0
    %v1101 = vadd.f32 %v972, %v1100
    %v1102 = vpop.f32.mrf.mxu0
    %v1103 = vadd.f32 %v976, %v1102
    %1104 = vmatprep.mubr.f32.mxu0 0.0
    %1105 = vmatmul.mubr.f32.gmra.mxu0 %v987
    %v1106 = vpop.f32.mrf.mxu0
    %v1107 = vadd.f32 %v972, %v1106
    %v1108 = vpop.f32.mrf.mxu0
    %v1109 = vadd.f32 %v976, %v1108
    %1110 = vmatprep.mubr.f32.mxu0 0.0
    %1111 = vmatmul.mubr.f32.gmra.mxu0 %v990
    %v1112 = vpop.f32.mrf.mxu0
    %v1113 = vadd.f32 %v972, %v1112
    %v1114 = vpop.f32.mrf.mxu0
    %v1115 = vadd.f32 %v976, %v1114
    %1116 = vmatprep.mubr.f32.mxu0 0.0
    %1117 = vmatmul.mubr.f32.gmra.mxu0 %v993
    %v1118 = vpop.f32.mrf.mxu0
    %v1119 = vadd.f32 %v972, %v1118
    %v1120 = vpop.f32.mrf.mxu0
    %v1121 = vadd.f32 %v976, %v1120
    %1122 = vmatprep.mubr.f32.mxu0 0.0
    %1123 = vmatmul.mubr.f32.gmra.mxu0 %v996
    %v1124 = vpop.f32.mrf.mxu0
    %v1125 = vadd.f32 %v972, %v1124
    %v1126 = vpop.f32.mrf.mxu0
    %v1127 = vadd.f32 %v976, %v1126
    %1128 = vmatprep.mubr.f32.mxu0 0.0
    %1129 = vmatmul.mubr.f32.gmra.mxu0 %v999
    %v1130 = vpop.f32.mrf.mxu0
    %v1131 = vadd.f32 %v972, %v1130
    %v1132 = vpop.f32.mrf.mxu0
    %v1133 = vadd.f32 %v976, %v1132
    %1134 = vmatprep.mubr.f32.mxu0 0.0
    %1135 = vmatmul.mubr.f32.gmra.mxu0 %v1002
    %v1136 = vpop.f32.mrf.mxu0
    %v1137 = vadd.f32 %v972, %v1136
    %v1138 = vpop.f32.mrf.mxu0
    %v1139 = vadd.f32 %v976, %v1138
    %1140 = vmatprep.mubr.f32.mxu0 0.0
    %1141 = vmatmul.mubr.f32.gmra.mxu0 %v1005
    %v1142 = vpop.f32.mrf.mxu0
    %v1143 = vadd.f32 %v972, %v1142
    %v1144 = vpop.f32.mrf.mxu0
    %v1145 = vadd.f32 %v976, %v1144
    %1146 = vmatprep.mubr.f32.mxu0 0.0
    %1147 = vmatmul.mubr.f32.gmra.mxu0 %v1008
    %v1148 = vpop.f32.mrf.mxu0
    %v1149 = vadd.f32 %v972, %v1148
    %v1150 = vpop.f32.mrf.mxu0
    %v1151 = vadd.f32 %v976, %v1150
    %1152 = vmatprep.mubr.f32.mxu0 0.0
    %1153 = vmatmul.mubr.f32.gmra.mxu0 %v1011
    %v1154 = vpop.f32.mrf.mxu0
    %v1155 = vadd.f32 %v972, %v1154
    %v1156 = vpop.f32.mrf.mxu0
    %v1157 = vadd.f32 %v976, %v1156
    %1158 = vmatprep.mubr.f32.mxu0 0.0
    %1159 = vmatmul.mubr.f32.gmra.mxu0 %v1014
    %v1160 = vpop.f32.mrf.mxu0
    %v1161 = vadd.f32 %v972, %v1160
    %v1162 = vpop.f32.mrf.mxu0
    %v1163 = vadd.f32 %v976, %v1162
    %1164 = vmatprep.mubr.f32.mxu0 0.0
    %1165 = vmatmul.mubr.f32.gmra.mxu0 %v1017
    %v1166 = vpop.f32.mrf.mxu0
    %v1167 = vadd.f32 %v972, %v1166
    %v1168 = vpop.f32.mrf.mxu0
    %v1169 = vadd.f32 %v976, %v1168
    %1170 = vmatprep.mubr.f32.mxu0 0.0
    %1171 = vmatmul.mubr.f32.gmra.mxu0 %v1020
    %v1172 = vpop.f32.mrf.mxu0
    %v1173 = vadd.f32 %v972, %v1172
    %v1174 = vpop.f32.mrf.mxu0
    %v1175 = vadd.f32 %v976, %v1174
    %1176 = vmatprep.mubr.f32.mxu0 0.0
    %1177 = vmatmul.mubr.f32.gmra.mxu0 %v1023
    %v1178 = vpop.f32.mrf.mxu0
    %v1179 = vadd.f32 %v972, %v1178
    %v1180 = vpop.f32.mrf.mxu0
    %v1181 = vadd.f32 %v976, %v1180
    %1182 = vmatprep.mubr.f32.mxu0 0.0
    %1183 = vmatmul.mubr.f32.gmra.mxu0 %v1026
    %v1184 = vpop.f32.mrf.mxu0
    %v1185 = vadd.f32 %v972, %v1184
    %v1186 = vpop.f32.mrf.mxu0
    %v1187 = vadd.f32 %v976, %v1186
    %1188 = vdwg.mxu0
    %1189 = vst [vmem:[%s10] sm:$0xff] %v1095
    %1190 = vst [vmem:[%s10 + $0x8] sm:$0xff] %v1097
    %1191 = vst [vmem:[%s10 + $0x10] sm:$0xff] %v1101
    %1192 = vst [vmem:[%s10 + $0x18] sm:$0xff] %v1103
    %1193 = vst [vmem:[%s10 + $0x20] sm:$0xff] %v1107
    %1194 = vst [vmem:[%s10 + $0x28] sm:$0xff] %v1109
    %1195 = vst [vmem:[%s10 + $0x30] sm:$0xff] %v1113
    %1196 = vst [vmem:[%s10 + $0x38] sm:$0xff] %v1115
    %1197 = vst [vmem:[%s10 + $0x40] sm:$0xff] %v1119
    %1198 = vst [vmem:[%s10 + $0x48] sm:$0xff] %v1121
    %1199 = vst [vmem:[%s10 + $0x50] sm:$0xff] %v1125
    %1200 = vst [vmem:[%s10 + $0x58] sm:$0xff] %v1127
    %1201 = vst [vmem:[%s10 + $0x60] sm:$0xff] %v1131
    %1202 = vst [vmem:[%s10 + $0x68] sm:$0xff] %v1133
    %1203 = vst [vmem:[%s10 + $0x70] sm:$0xff] %v1137
    %1204 = vst [vmem:[%s10 + $0x78] sm:$0xff] %v1139
    %1205 = vst [vmem:[%s10 + $0x80] sm:$0xff] %v1143
    %1206 = vst [vmem:[%s10 + $0x88] sm:$0xff] %v1145
    %1207 = vst [vmem:[%s10 + $0x90] sm:$0xff] %v1149
    %1208 = vst [vmem:[%s10 + $0x98] sm:$0xff] %v1151
    %1209 = vst [vmem:[%s10 + $0xa0] sm:$0xff] %v1155
    %1210 = vst [vmem:[%s10 + $0xa8] sm:$0xff] %v1157
    %1211 = vst [vmem:[%s10 + $0xb0] sm:$0xff] %v1161
    %1212 = vst [vmem:[%s10 + $0xb8] sm:$0xff] %v1163
    %1213 = vst [vmem:[%s10 + $0xc0] sm:$0xff] %v1167
    %1214 = vst [vmem:[%s10 + $0xc8] sm:$0xff] %v1169
    %1215 = vst [vmem:[%s10 + $0xd0] sm:$0xff] %v1173
    %1216 = vst [vmem:[%s10 + $0xd8] sm:$0xff] %v1175
    %1217 = vst [vmem:[%s10 + $0xe0] sm:$0xff] %v1179
    %1218 = vst [vmem:[%s10 + $0xe8] sm:$0xff] %v1181
    %1219 = vst [vmem:[%s10 + $0xf0] sm:$0xff] %v1185
    %1220 = vst [vmem:[%s10 + $0xf8] sm:$0xff] %v1187
  $region49: #{vae_forward.1} parent=0 // pred_fallthru
    _
  // Predicated region
  $region50: #{vae_forward.1} parent=0 // pred_check
    _
  $region51: #{vae_forward.1} parent=0 // pred_check_branch
    %1222 = sbr.rel (0) target = $region53
  $region52: #{vae_forward.1} parent=0 // pred_region
    _
  $region53: #{vae_forward.1} parent=0 // pred_fallthru
    _
  // Predicated region
  $region54: #{vae_forward.1} parent=0 // pred_check
    _
  $region55: #{vae_forward.1} parent=0 // pred_check_branch
    %1224 = sbr.rel (0) target = $region57
  $region56: #{vae_forward.1} parent=0 // pred_region
    _
  $region57: #{vae_forward.1} parent=0 // pred_fallthru
    _

</llo_original>
